<compile_context>
chip_gen: v6e
topology: v6e:2x2x1
jax: 0.10.0
libtpu: 0.0.40
codegen_flags: <defaults>
</compile_context>

<pallas_src>
import math

import jax
import jax.numpy as jnp
from jax.experimental import pallas as pl
from jax.experimental.pallas import tpu as pltpu


def _make_alignment_kernel(B, Lq, Lk):
    def kernel(r1_ref, r2_ref, tgt_ref,
               wq_ref, bq_ref, wk_ref, bk_ref,
               scores_ref, loss_ref):
        # Fused projections over all rows of the whole batch at once.
        #   q: (B*Lq, A)  -- scale 1/sqrt(A) already folded into wq/bq
        #   k: (B*Lk, A)
        q = jnp.dot(r1_ref[...], wq_ref[...],
                    preferred_element_type=jnp.float32) + bq_ref[...]
        k = jnp.dot(r2_ref[...], wk_ref[...],
                    preferred_element_type=jnp.float32) + bk_ref[...]

        sse = jnp.float32(0.0)
        cnt = jnp.float32(0.0)

        # Tiny static batch: per-batch score product + softmax + masked-MSE partials.
        # (Only the q@k^T product is inherently per-batch; projections were shared above.)
        for b in range(B):
            qb = q[b * Lq:(b + 1) * Lq, :]          # (Lq, A)
            kb = k[b * Lk:(b + 1) * Lk, :]          # (Lk, A)
            s = jax.lax.dot_general(qb, kb,
                                    (((1,), (1,)), ((), ())),
                                    preferred_element_type=jnp.float32)   # (Lq, Lk)
            m = jnp.max(s, axis=-1, keepdims=True)
            e = jnp.exp(s - m)
            p = e * pl.reciprocal(jnp.sum(e, axis=-1, keepdims=True))
            scores_ref[b] = p.astype(scores_ref.dtype)

            tgt = tgt_ref[b].astype(jnp.float32)    # (Lq, Lk)
            mask = tgt != -100.0
            diff = jnp.where(mask, p - tgt, 0.0)
            sse = sse + jnp.sum(diff * diff)
            cnt = cnt + jnp.sum(mask.astype(jnp.float32))

        loss_ref[...] = jnp.full((1, 1), sse / cnt, jnp.float32)

    return kernel


def alignment_forward(params, batch, repr1, repr2, return_instances=False):
    target = batch['alignment'].astype(jnp.float32)
    B, Lq, D1 = repr1.shape
    _, Lk, D2 = repr2.shape
    A = params['query_proj_w'].shape[0]   # attn_dim
    scale = 1.0 / math.sqrt(A)

    # --- Offline algebraic fusion of the chained linears (one-off AxA matmuls) ---
    #   q2 = (r1 @ Wqp^T + bqp) @ Wq^T + bq  ==  r1 @ (Wqp^T Wq^T) + (bqp Wq^T + bq)
    # and the 1/sqrt(A) attention scale is folded into the query branch.
    w_q_eff = (params['query_proj_w'].T @ params['attn_q_w'].T) * scale          # (D1, A)
    b_q_eff = ((params['query_proj_b'] @ params['attn_q_w'].T
                + params['attn_q_b']) * scale).reshape(1, A)
    w_k_eff = params['key_proj_w'].T @ params['attn_k_w'].T                      # (D2, A)
    b_k_eff = (params['key_proj_b'] @ params['attn_k_w'].T
               + params['attn_k_b']).reshape(1, A)

    # Flatten the batch into the matmul M dimension (free reshapes in the wrapper).
    r1_flat = repr1.reshape(B * Lq, D1)
    r2_flat = repr2.reshape(B * Lk, D2)

    # Single grid step: everything fits comfortably in VMEM at these sizes, so no
    # per-batch grid loop, no cross-iteration accumulator, no pipeline bubbles.
    # TODO(synk): for production-scale Lq/Lk, re-tile over (Lq, Lk) with an online
    # softmax and mark the row axis "parallel" so v7x's two TensorCores split work.
    grid_spec = pltpu.PrefetchScalarGridSpec(
        num_scalar_prefetch=0,
        grid=(1,),
        in_specs=[
            pl.BlockSpec((B * Lq, D1), lambda i: (0, 0)),     # repr1 (flattened)
            pl.BlockSpec((B * Lk, D2), lambda i: (0, 0)),     # repr2 (flattened)
            pl.BlockSpec((B, Lq, Lk), lambda i: (0, 0, 0)),   # target
            pl.BlockSpec((D1, A), lambda i: (0, 0)),          # fused query weight
            pl.BlockSpec((1, A), lambda i: (0, 0)),           # fused query bias
            pl.BlockSpec((D2, A), lambda i: (0, 0)),          # fused key weight
            pl.BlockSpec((1, A), lambda i: (0, 0)),           # fused key bias
        ],
        out_specs=[
            pl.BlockSpec((B, Lq, Lk), lambda i: (0, 0, 0)),   # attn_scores
            pl.BlockSpec((1, 1), lambda i: (0, 0)),           # loss
        ],
    )

    scores, loss = pl.pallas_call(
        _make_alignment_kernel(B, Lq, Lk),
        grid_spec=grid_spec,
        out_shape=(
            jax.ShapeDtypeStruct((B, Lq, Lk), jnp.float32),
            jax.ShapeDtypeStruct((1, 1), jnp.float32),
        ),
        compiler_params=pltpu.CompilerParams(dimension_semantics=("arbitrary",)),
    )(r1_flat, r2_flat, target, w_q_eff, b_q_eff, w_k_eff, b_k_eff)

    result = {'loss': loss[0, 0]}
    if return_instances:
        result['alignment_pred'] = scores
        result['alignment_target'] = target
    return result


def alignment_reference(params, batch, repr1, repr2):
    """Pure-JAX reference matching the PyTorch module (un-fused, two-stage linears)."""
    target = batch['alignment'].astype(jnp.float32)
    A = params['query_proj_w'].shape[0]
    q1 = repr1 @ params['query_proj_w'].T + params['query_proj_b']
    k1 = repr2 @ params['key_proj_w'].T + params['key_proj_b']
    q2 = q1 @ params['attn_q_w'].T + params['attn_q_b']
    k2 = k1 @ params['attn_k_w'].T + params['attn_k_b']
    s = (q2 / math.sqrt(A)) @ jnp.swapaxes(k2, -1, -2)
    p = jax.nn.softmax(s, axis=-1)
    mask = target != -100.0
    diff = jnp.where(mask, p - target, 0.0)
    loss = jnp.sum(diff * diff) / jnp.sum(mask.astype(jnp.float32))
    return loss, p


def _uniform(key, shape, bound):
    return jax.random.uniform(key, shape, jnp.float32, -bound, bound)


if __name__ == "__main__":
    # Small, module-consistent sizes.
    B, Lq, Lk = 2, 8, 16
    repr1_dim, repr2_dim, attn_dim = 32, 48, 32

    root = jax.random.PRNGKey(0)
    keys = jax.random.split(root, 12)

    # Deterministic synthetic parameters (PyTorch-like uniform fan-in init).
    params = {
        'query_proj_w': _uniform(keys[0], (attn_dim, repr1_dim), 1.0 / math.sqrt(repr1_dim)),
        'query_proj_b': _uniform(keys[1], (attn_dim,), 1.0 / math.sqrt(repr1_dim)),
        'key_proj_w':   _uniform(keys[2], (attn_dim, repr2_dim), 1.0 / math.sqrt(repr2_dim)),
        'key_proj_b':   _uniform(keys[3], (attn_dim,), 1.0 / math.sqrt(repr2_dim)),
        'attn_q_w':     _uniform(keys[4], (attn_dim, attn_dim), 1.0 / math.sqrt(attn_dim)),
        'attn_q_b':     _uniform(keys[5], (attn_dim,), 1.0 / math.sqrt(attn_dim)),
        'attn_k_w':     _uniform(keys[6], (attn_dim, attn_dim), 1.0 / math.sqrt(attn_dim)),
        'attn_k_b':     _uniform(keys[7], (attn_dim,), 1.0 / math.sqrt(attn_dim)),
    }

    repr1 = jax.random.normal(keys[8], (B, Lq, repr1_dim), jnp.float32)
    repr2 = jax.random.normal(keys[9], (B, Lk, repr2_dim), jnp.float32)

    # Alignment targets in [0,1] with ~30% entries masked out via the -100 sentinel.
    tgt_vals = jax.random.uniform(keys[10], (B, Lq, Lk), jnp.float32)
    drop = jax.random.bernoulli(keys[11], 0.3, (B, Lq, Lk))
    target = jnp.where(drop, jnp.float32(-100.0), tgt_vals)
    batch = {'alignment': target}

    out = alignment_forward(params, batch, repr1, repr2, return_instances=True)
    jax.block_until_ready(out['loss'])
    jax.block_until_ready(out['alignment_pred'])

    ref_loss, ref_scores = alignment_reference(params, batch, repr1, repr2)
    # Slightly relaxed tolerance: offline weight fusion changes rounding order.
    assert jnp.allclose(out['loss'], ref_loss, rtol=1e-4, atol=1e-5), (out['loss'], ref_loss)
    assert jnp.allclose(out['alignment_pred'], ref_scores, rtol=1e-4, atol=1e-5)

    print("KERNEL_OK")
</pallas_src>

<mosaic_0001>
module attributes {stable_mosaic.version = 11 : i64} {
  func.func @kernel(%arg0: i32, %arg1: memref<16x32xf32, #tpu.memory_space<vmem>>, %arg2: memref<32x48xf32, #tpu.memory_space<vmem>>, %arg3: memref<2x8x16xf32, #tpu.memory_space<vmem>>, %arg4: memref<32x32xf32, #tpu.memory_space<vmem>>, %arg5: memref<1x32xf32, #tpu.memory_space<vmem>>, %arg6: memref<48x32xf32, #tpu.memory_space<vmem>>, %arg7: memref<1x32xf32, #tpu.memory_space<vmem>>, %arg8: memref<2x8x16xf32, #tpu.memory_space<vmem>>, %arg9: memref<1x1xf32, #tpu.memory_space<vmem>>) attributes {dimension_semantics = [#tpu.dimension_semantics<arbitrary>], iteration_bounds = array<i64: 1>, scalar_prefetch = 0 : i64, scratch_operands = 0 : i64, tpu.core_type = #tpu.core_type<tc>, window_params = [{pipeline_mode = #tpu.pipeline_mode<synchronous>, transform_indices = @transform_0, window_bounds = array<i64: 16, 32>}, {pipeline_mode = #tpu.pipeline_mode<synchronous>, transform_indices = @transform_1, window_bounds = array<i64: 32, 48>}, {pipeline_mode = #tpu.pipeline_mode<synchronous>, transform_indices = @transform_2, window_bounds = array<i64: 2, 8, 16>}, {pipeline_mode = #tpu.pipeline_mode<synchronous>, transform_indices = @transform_3, window_bounds = array<i64: 32, 32>}, {pipeline_mode = #tpu.pipeline_mode<synchronous>, transform_indices = @transform_4, window_bounds = array<i64: 1, 32>}, {pipeline_mode = #tpu.pipeline_mode<synchronous>, transform_indices = @transform_5, window_bounds = array<i64: 48, 32>}, {pipeline_mode = #tpu.pipeline_mode<synchronous>, transform_indices = @transform_6, window_bounds = array<i64: 1, 32>}, {pipeline_mode = #tpu.pipeline_mode<synchronous>, transform_indices = @transform_7, window_bounds = array<i64: 2, 8, 16>}, {pipeline_mode = #tpu.pipeline_mode<synchronous>, transform_indices = @transform_8, window_bounds = array<i64: 1, 1>}]} {
    %c0 = arith.constant 0 : index
    %c0_0 = arith.constant 0 : index
    %0 = vector.load %arg1[%c0, %c0_0] : memref<16x32xf32, #tpu.memory_space<vmem>>, vector<16x32xf32>
    %c0_1 = arith.constant 0 : index
    %c0_2 = arith.constant 0 : index
    %1 = vector.load %arg4[%c0_1, %c0_2] : memref<32x32xf32, #tpu.memory_space<vmem>>, vector<32x32xf32>
    %cst = arith.constant dense<0.000000e+00> : vector<16x32xf32>
    %2 = tpu.matmul %0, %1, %cst {dimension_numbers = #tpu.dot_dimension_numbers<[1], [0], [0], [1], [0, 0, 1, 1], [], []>} : vector<16x32xf32>, vector<32x32xf32>, vector<16x32xf32> -> vector<16x32xf32>
    %c0_3 = arith.constant 0 : index
    %c0_4 = arith.constant 0 : index
    %3 = vector.load %arg5[%c0_3, %c0_4] : memref<1x32xf32, #tpu.memory_space<vmem>>, vector<1x32xf32>
    %4 = vector.broadcast %3 : vector<1x32xf32> to vector<16x32xf32>
    %5 = arith.addf %2, %4 : vector<16x32xf32>
    %c0_5 = arith.constant 0 : index
    %c0_6 = arith.constant 0 : index
    %6 = vector.load %arg2[%c0_5, %c0_6] : memref<32x48xf32, #tpu.memory_space<vmem>>, vector<32x48xf32>
    %c0_7 = arith.constant 0 : index
    %c0_8 = arith.constant 0 : index
    %7 = vector.load %arg6[%c0_7, %c0_8] : memref<48x32xf32, #tpu.memory_space<vmem>>, vector<48x32xf32>
    %cst_9 = arith.constant dense<0.000000e+00> : vector<32x32xf32>
    %8 = tpu.matmul %6, %7, %cst_9 {dimension_numbers = #tpu.dot_dimension_numbers<[1], [0], [0], [1], [0, 0, 1, 1], [], []>} : vector<32x48xf32>, vector<48x32xf32>, vector<32x32xf32> -> vector<32x32xf32>
    %c0_10 = arith.constant 0 : index
    %c0_11 = arith.constant 0 : index
    %9 = vector.load %arg7[%c0_10, %c0_11] : memref<1x32xf32, #tpu.memory_space<vmem>>, vector<1x32xf32>
    %10 = vector.broadcast %9 : vector<1x32xf32> to vector<32x32xf32>
    %11 = arith.addf %8, %10 : vector<32x32xf32>
    %12 = vector.extract_strided_slice %5 {offsets = [0, 0], sizes = [8, 32], strides = [1, 1]} : vector<16x32xf32> to vector<8x32xf32>
    %13 = vector.extract_strided_slice %11 {offsets = [0, 0], sizes = [16, 32], strides = [1, 1]} : vector<32x32xf32> to vector<16x32xf32>
    %cst_12 = arith.constant dense<0.000000e+00> : vector<8x16xf32>
    %14 = tpu.matmul %12, %13, %cst_12 {dimension_numbers = #tpu.dot_dimension_numbers<[1], [1], [0], [0], [0, 0, 1, 0], [], []>} : vector<8x32xf32>, vector<16x32xf32>, vector<8x16xf32> -> vector<8x16xf32>
    %cst_13 = arith.constant dense<0xFF800000> : vector<8xf32>
    %15 = vector.multi_reduction <maximumf>, %14, %cst_13 [1] : vector<8x16xf32> to vector<8xf32>
    %16 = vector.shape_cast %15 : vector<8xf32> to vector<8x1xf32>
    %17 = vector.broadcast %16 : vector<8x1xf32> to vector<8x16xf32>
    %18 = arith.subf %14, %17 : vector<8x16xf32>
    %19 = math.exp %18 : vector<8x16xf32>
    %cst_14 = arith.constant dense<0.000000e+00> : vector<8xf32>
    %20 = vector.multi_reduction <add>, %19, %cst_14 [1] : vector<8x16xf32> to vector<8xf32>
    %21 = vector.shape_cast %20 : vector<8xf32> to vector<8x1xf32>
    %22 = tpu.reciprocal %21 : vector<8x1xf32> -> vector<8x1xf32>
    %23 = vector.broadcast %22 : vector<8x1xf32> to vector<8x16xf32>
    %24 = arith.mulf %19, %23 : vector<8x16xf32>
    %c0_15 = arith.constant 0 : index
    %c0_16 = arith.constant 0 : index
    %c0_17 = arith.constant 0 : index
    %25 = vector.load %arg8[%c0_15, %c0_16, %c0_17] : memref<2x8x16xf32, #tpu.memory_space<vmem>>, vector<1x8x16xf32>
    %26 = vector.shape_cast %25 : vector<1x8x16xf32> to vector<8x16xf32>
    %27 = vector.shape_cast %24 : vector<8x16xf32> to vector<1x8x16xf32>
    tpu.vector_store %arg8[%c0_15, %c0_16, %c0_17], %27 {strides = array<i32>} : memref<2x8x16xf32, #tpu.memory_space<vmem>>, vector<1x8x16xf32>,
    %c0_18 = arith.constant 0 : index
    %c0_19 = arith.constant 0 : index
    %c0_20 = arith.constant 0 : index
    %28 = vector.load %arg3[%c0_18, %c0_19, %c0_20] : memref<2x8x16xf32, #tpu.memory_space<vmem>>, vector<1x8x16xf32>
    %29 = vector.shape_cast %28 : vector<1x8x16xf32> to vector<8x16xf32>
    %cst_21 = arith.constant -1.000000e+02 : f32
    %30 = vector.broadcast %cst_21 : f32 to vector<8x16xf32>
    %31 = arith.cmpf one, %29, %30 : vector<8x16xf32>
    %32 = arith.subf %24, %29 : vector<8x16xf32>
    %cst_22 = arith.constant 0.000000e+00 : f32
    %33 = vector.broadcast %cst_22 : f32 to vector<8x16xf32>
    %34 = arith.select %31, %32, %33 : vector<8x16xi1>, vector<8x16xf32>
    %35 = arith.mulf %34, %34 : vector<8x16xf32>
    %36 = vector.shape_cast %35 : vector<8x16xf32> to vector<1x8x16xf32>
    %cst_23 = arith.constant dense<0.000000e+00> : vector<1xf32>
    %37 = vector.multi_reduction <add>, %36, %cst_23 [1, 2] : vector<1x8x16xf32> to vector<1xf32>
    %38 = vector.shape_cast %37 : vector<1xf32> to vector<1x1x1xf32>
    %39 = vector.extract %38[0, 0, 0] : f32 from vector<1x1x1xf32>
    %cst_24 = arith.constant 0.000000e+00 : f32
    %40 = arith.addf %cst_24, %39 : f32
    %41 = arith.extui %31 : vector<8x16xi1> to vector<8x16xi32>
    %42 = arith.sitofp %41 : vector<8x16xi32> to vector<8x16xf32>
    %43 = vector.shape_cast %42 : vector<8x16xf32> to vector<1x8x16xf32>
    %cst_25 = arith.constant dense<0.000000e+00> : vector<1xf32>
    %44 = vector.multi_reduction <add>, %43, %cst_25 [1, 2] : vector<1x8x16xf32> to vector<1xf32>
    %45 = vector.shape_cast %44 : vector<1xf32> to vector<1x1x1xf32>
    %46 = vector.extract %45[0, 0, 0] : f32 from vector<1x1x1xf32>
    %cst_26 = arith.constant 0.000000e+00 : f32
    %47 = arith.addf %cst_26, %46 : f32
    %48 = vector.extract_strided_slice %5 {offsets = [8, 0], sizes = [8, 32], strides = [1, 1]} : vector<16x32xf32> to vector<8x32xf32>
    %49 = vector.extract_strided_slice %11 {offsets = [16, 0], sizes = [16, 32], strides = [1, 1]} : vector<32x32xf32> to vector<16x32xf32>
    %cst_27 = arith.constant dense<0.000000e+00> : vector<8x16xf32>
    %50 = tpu.matmul %48, %49, %cst_27 {dimension_numbers = #tpu.dot_dimension_numbers<[1], [1], [0], [0], [0, 0, 1, 0], [], []>} : vector<8x32xf32>, vector<16x32xf32>, vector<8x16xf32> -> vector<8x16xf32>
    %cst_28 = arith.constant dense<0xFF800000> : vector<8xf32>
    %51 = vector.multi_reduction <maximumf>, %50, %cst_28 [1] : vector<8x16xf32> to vector<8xf32>
    %52 = vector.shape_cast %51 : vector<8xf32> to vector<8x1xf32>
    %53 = vector.broadcast %52 : vector<8x1xf32> to vector<8x16xf32>
    %54 = arith.subf %50, %53 : vector<8x16xf32>
    %55 = math.exp %54 : vector<8x16xf32>
    %cst_29 = arith.constant dense<0.000000e+00> : vector<8xf32>
    %56 = vector.multi_reduction <add>, %55, %cst_29 [1] : vector<8x16xf32> to vector<8xf32>
    %57 = vector.shape_cast %56 : vector<8xf32> to vector<8x1xf32>
    %58 = tpu.reciprocal %57 : vector<8x1xf32> -> vector<8x1xf32>
    %59 = vector.broadcast %58 : vector<8x1xf32> to vector<8x16xf32>
    %60 = arith.mulf %55, %59 : vector<8x16xf32>
    %c1 = arith.constant 1 : index
    %c0_30 = arith.constant 0 : index
    %c0_31 = arith.constant 0 : index
    %61 = vector.load %arg8[%c1, %c0_30, %c0_31] : memref<2x8x16xf32, #tpu.memory_space<vmem>>, vector<1x8x16xf32>
    %62 = vector.shape_cast %61 : vector<1x8x16xf32> to vector<8x16xf32>
    %63 = vector.shape_cast %60 : vector<8x16xf32> to vector<1x8x16xf32>
    tpu.vector_store %arg8[%c1, %c0_30, %c0_31], %63 {strides = array<i32>} : memref<2x8x16xf32, #tpu.memory_space<vmem>>, vector<1x8x16xf32>,
    %c1_32 = arith.constant 1 : index
    %c0_33 = arith.constant 0 : index
    %c0_34 = arith.constant 0 : index
    %64 = vector.load %arg3[%c1_32, %c0_33, %c0_34] : memref<2x8x16xf32, #tpu.memory_space<vmem>>, vector<1x8x16xf32>
    %65 = vector.shape_cast %64 : vector<1x8x16xf32> to vector<8x16xf32>
    %cst_35 = arith.constant -1.000000e+02 : f32
    %66 = vector.broadcast %cst_35 : f32 to vector<8x16xf32>
    %67 = arith.cmpf one, %65, %66 : vector<8x16xf32>
    %68 = arith.subf %60, %65 : vector<8x16xf32>
    %cst_36 = arith.constant 0.000000e+00 : f32
    %69 = vector.broadcast %cst_36 : f32 to vector<8x16xf32>
    %70 = arith.select %67, %68, %69 : vector<8x16xi1>, vector<8x16xf32>
    %71 = arith.mulf %70, %70 : vector<8x16xf32>
    %72 = vector.shape_cast %71 : vector<8x16xf32> to vector<1x8x16xf32>
    %cst_37 = arith.constant dense<0.000000e+00> : vector<1xf32>
    %73 = vector.multi_reduction <add>, %72, %cst_37 [1, 2] : vector<1x8x16xf32> to vector<1xf32>
    %74 = vector.shape_cast %73 : vector<1xf32> to vector<1x1x1xf32>
    %75 = vector.extract %74[0, 0, 0] : f32 from vector<1x1x1xf32>
    %76 = arith.addf %40, %75 : f32
    %77 = arith.extui %67 : vector<8x16xi1> to vector<8x16xi32>
    %78 = arith.sitofp %77 : vector<8x16xi32> to vector<8x16xf32>
    %79 = vector.shape_cast %78 : vector<8x16xf32> to vector<1x8x16xf32>
    %cst_38 = arith.constant dense<0.000000e+00> : vector<1xf32>
    %80 = vector.multi_reduction <add>, %79, %cst_38 [1, 2] : vector<1x8x16xf32> to vector<1xf32>
    %81 = vector.shape_cast %80 : vector<1xf32> to vector<1x1x1xf32>
    %82 = vector.extract %81[0, 0, 0] : f32 from vector<1x1x1xf32>
    %83 = arith.addf %47, %82 : f32
    %84 = arith.divf %76, %83 : f32
    %85 = vector.broadcast %84 : f32 to vector<1x1xf32>
    %c0_39 = arith.constant 0 : index
    %c0_40 = arith.constant 0 : index
    %86 = vector.load %arg9[%c0_39, %c0_40] : memref<1x1xf32, #tpu.memory_space<vmem>>, vector<1x1xf32>
    tpu.vector_store %arg9[%c0_39, %c0_40], %85 {strides = array<i32>} : memref<1x1xf32, #tpu.memory_space<vmem>>, vector<1x1xf32>,
    return
  }
  func.func @transform_0(%arg0: i32) -> (i32, i32) {
    %c0_i32 = arith.constant 0 : i32
    %c0_i32_0 = arith.constant 0 : i32
    %c0_i32_1 = arith.constant 0 : i32
    return %c0_i32, %c0_i32_0 : i32, i32
  }
  func.func @transform_1(%arg0: i32) -> (i32, i32) {
    %c0_i32 = arith.constant 0 : i32
    %c0_i32_0 = arith.constant 0 : i32
    %c0_i32_1 = arith.constant 0 : i32
    return %c0_i32, %c0_i32_0 : i32, i32
  }
  func.func @transform_2(%arg0: i32) -> (i32, i32, i32) {
    %c0_i32 = arith.constant 0 : i32
    %c0_i32_0 = arith.constant 0 : i32
    %c0_i32_1 = arith.constant 0 : i32
    %c0_i32_2 = arith.constant 0 : i32
    return %c0_i32, %c0_i32_0, %c0_i32_1 : i32, i32, i32
  }
  func.func @transform_3(%arg0: i32) -> (i32, i32) {
    %c0_i32 = arith.constant 0 : i32
    %c0_i32_0 = arith.constant 0 : i32
    %c0_i32_1 = arith.constant 0 : i32
    return %c0_i32, %c0_i32_0 : i32, i32
  }
  func.func @transform_4(%arg0: i32) -> (i32, i32) {
    %c0_i32 = arith.constant 0 : i32
    %c0_i32_0 = arith.constant 0 : i32
    %c0_i32_1 = arith.constant 0 : i32
    return %c0_i32, %c0_i32_0 : i32, i32
  }
  func.func @transform_5(%arg0: i32) -> (i32, i32) {
    %c0_i32 = arith.constant 0 : i32
    %c0_i32_0 = arith.constant 0 : i32
    %c0_i32_1 = arith.constant 0 : i32
    return %c0_i32, %c0_i32_0 : i32, i32
  }
  func.func @transform_6(%arg0: i32) -> (i32, i32) {
    %c0_i32 = arith.constant 0 : i32
    %c0_i32_0 = arith.constant 0 : i32
    %c0_i32_1 = arith.constant 0 : i32
    return %c0_i32, %c0_i32_0 : i32, i32
  }
  func.func @transform_7(%arg0: i32) -> (i32, i32, i32) {
    %c0_i32 = arith.constant 0 : i32
    %c0_i32_0 = arith.constant 0 : i32
    %c0_i32_1 = arith.constant 0 : i32
    %c0_i32_2 = arith.constant 0 : i32
    return %c0_i32, %c0_i32_0, %c0_i32_1 : i32, i32, i32
  }
  func.func @transform_8(%arg0: i32) -> (i32, i32) {
    %c0_i32 = arith.constant 0 : i32
    %c0_i32_0 = arith.constant 0 : i32
    %c0_i32_1 = arith.constant 0 : i32
    return %c0_i32, %c0_i32_0 : i32, i32
  }
}

</mosaic_0001>

<llo_original>
// kernel: tpu_custom_call.1
$region0: #{tpu_custom_call.1}
  #allocation0 [shape = 'u32[]', space=smem, size = 0x4, offset = 0x4, fixed_abs, tag = 'smem constant byte address 0x4 - core index']
  #allocation1 [shape = 'u32[144,128]{1,0:T(1,128)}', space=vmem, size = 0x12000, scoped, tag = 'internal scratch']
  %s0 = inlined_call_operand.vmem [shape: f32[16,32], index: 0, kind: input, shape index: {}]
  %s1 = inlined_call_operand.vmem [shape: f32[32,48], index: 1, kind: input, shape index: {}]
  %s2 = inlined_call_operand.hbm [shape: f32[2,8,16], index: 2, kind: input, shape index: {}]
  %s3 = inlined_call_operand.vmem [shape: f32[32,32], index: 3, kind: input, shape index: {}]
  %s4 = inlined_call_operand.vmem [shape: f32[1,32], index: 4, kind: input, shape index: {}]
  %s5 = inlined_call_operand.vmem [shape: f32[48,32], index: 5, kind: input, shape index: {}]
  %s6 = inlined_call_operand.vmem [shape: f32[1,32], index: 6, kind: input, shape index: {}]
  %s7 = inlined_call_operand.hbm [shape: f32[2,8,16], index: 7, kind: output, shape index: {0}]
  %s8 = inlined_call_operand.hbm [shape: f32[1,1], index: 8, kind: output, shape index: {1}]
  %9 = xla_tuple %s7, %s8
  %s10 = sld [smem:[#allocation0]]
  $region50: #{tpu_custom_call.1} parent=0
    _
  %s12 = ssub.s32 1, %s10
  %s13 = scalar_select 0, %s12, %s10
  $region1: #{tpu_custom_call.1} parent=0
    #allocation2 [shape = 'u8[8192]{0}', space=vmem, size = 0x2000, scoped, tag = 'input window, operand 2, single buffered']
    #allocation3 [shape = 's32[1]{0}', space=sflag, size = 0x4, scoped, tag = 'scoped memory for tpu_custom_call.1']
    #allocation4 [shape = 's32[1]{0}', space=sflag, size = 0x4, scoped, tag = 'scoped memory for tpu_custom_call.1']
    #allocation5 [shape = 'u8[8192]{0}', space=vmem, size = 0x2000, scoped, tag = 'output window, operand 0, single buffered']
    #allocation6 [shape = 'u8[512]{0}', space=vmem, size = 0x400, scoped, tag = 'output window, operand 1, single buffered']
    #allocation7 [shape = 's32[1]{0}', space=sflag, size = 0x4, scoped, tag = 'scoped memory for tpu_custom_call.1']
    %14 = vsyncpa [#allocation3], 0
    %15 = vsyncpa [#allocation4], 0
    %16 = vsyncpa [#allocation7], 0
    // Predicated region
    $region2: #{tpu_custom_call.1} parent=1 // pred_check
      _
    $region3: #{tpu_custom_call.1} parent=1 // pred_check_branch
      %18 = sbr.rel (0) target = $region5
    $region4: #{tpu_custom_call.1} parent=1 // pred_region
      _
    $region5: #{tpu_custom_call.1} parent=1 // pred_fallthru
      _
    // Predicated region
    $region6: #{tpu_custom_call.1} parent=1 // pred_check
      _
    $region7: #{tpu_custom_call.1} parent=1 // pred_check_branch
      %20 = sbr.rel (0) target = $region9
    $region8: #{tpu_custom_call.1} parent=1 // pred_region
      _
    $region9: #{tpu_custom_call.1} parent=1 // pred_fallthru
      _
    // Predicated region
    $region10: #{tpu_custom_call.1} parent=1 // pred_check
      _
    $region11: #{tpu_custom_call.1} parent=1 // pred_check_branch
      %22 = sbr.rel (0) target = $region13
    $region12: #{tpu_custom_call.1} parent=1 // pred_region
      %s24 = ssub.s32 256, 256
      %25 = vsyncadd [#allocation3], %s24
      %s26 = sshll.u32 [#allocation2], 4
      %s27 = int_to_ptr.vmem [resolvable:$true] %s26
      %32 = dma.hbm_to_vmem [thread:$0]  %s2, 256, %s27, [#allocation3], 128, 128, 8
    $region13: #{tpu_custom_call.1} parent=1 // pred_fallthru
      _
    // Predicated region
    $region14: #{tpu_custom_call.1} parent=1 // pred_check
      _
    $region15: #{tpu_custom_call.1} parent=1 // pred_check_branch
      %34 = sbr.rel (0) target = $region17
    $region16: #{tpu_custom_call.1} parent=1 // pred_region
      _
    $region17: #{tpu_custom_call.1} parent=1 // pred_fallthru
      _
    // Predicated region
    $region18: #{tpu_custom_call.1} parent=1 // pred_check
      _
    $region19: #{tpu_custom_call.1} parent=1 // pred_check_branch
      %36 = sbr.rel (0) target = $region21
    $region20: #{tpu_custom_call.1} parent=1 // pred_region
      _
    $region21: #{tpu_custom_call.1} parent=1 // pred_fallthru
      _
    // Predicated region
    $region22: #{tpu_custom_call.1} parent=1 // pred_check
      _
    $region23: #{tpu_custom_call.1} parent=1 // pred_check_branch
      %38 = sbr.rel (0) target = $region25
    $region24: #{tpu_custom_call.1} parent=1 // pred_region
      _
    $region25: #{tpu_custom_call.1} parent=1 // pred_fallthru
      _
    // Predicated region
    $region26: #{tpu_custom_call.1} parent=1 // pred_check
      _
    $region27: #{tpu_custom_call.1} parent=1 // pred_check_branch
      %40 = sbr.rel (0) target = $region29
    $region28: #{tpu_custom_call.1} parent=1 // pred_region
      _
    $region29: #{tpu_custom_call.1} parent=1 // pred_fallthru
      _
    // Predicated region
    $region30: #{tpu_custom_call.1} parent=1 // pred_check
      _
    $region31: #{tpu_custom_call.1} parent=1 // pred_check_branch
      %42 = sbr.rel (0) target = $region33
    $region32: #{tpu_custom_call.1} parent=1 // pred_region
      %43 = dma.done [#allocation3], 256
    $region33: #{tpu_custom_call.1} parent=1 // pred_fallthru
      _
    %v44 = vld [vmem:[%s0] sm:$0xff]
    %v45 = vld [vmem:[%s0 + $0x8] sm:$0xff]
    %v46 = vld [vmem:[%s3] sm:$0xff]
    %v47 = vld [vmem:[%s3 + $0x8] sm:$0xff]
    %v48 = vld [vmem:[%s3 + $0x10] sm:$0xff]
    %v49 = vld [vmem:[%s3 + $0x18] sm:$0xff]
    %v50 = vld [vmem:[%s4] sm:$0x1]
    %v52 = vlaneseq
    %v53 = vshrl.u32 %v52, 7
    %v54 = vsub.s32 0, %v53
    %v55 = vrot.slane %v50, %v54
    %vm57 = vcmask 261120
    %v59 = vsel %vm57, %v44, 0
    %v62 = vsel %vm57, %v45, 0
    %64 = vmatprep.subr.mxu0 0.0
    %65 = vmatpush1.msra.mxu0 0.0
    %66 = vmatprep.subr.mxu0 0.0
    %67 = vmatpush1.msra.mxu0 0.0
    %68 = vmatprep.subr.mxu0 0.0
    %69 = vmatpush1.msra.mxu0 0.0
    %70 = vmatprep.subr.mxu0 0.0
    %71 = vmatpush1.msra.mxu0 0.0
    %72 = vmatprep.subr.mxu0 0.0
    %73 = vmatpush1.msra.mxu0 0.0
    %74 = vmatprep.subr.mxu0 0.0
    %75 = vmatpush1.msra.mxu0 0.0
    %76 = vmatprep.subr.mxu0 0.0
    %77 = vmatpush1.msra.mxu0 0.0
    %78 = vmatprep.subr.mxu0 0.0
    %79 = vmatpush1.msra.mxu0 0.0
    %80 = vmatprep.subr.mxu0 0.0
    %81 = vmatpush1.msra.mxu0 0.0
    %82 = vmatprep.subr.mxu0 0.0
    %83 = vmatpush1.msra.mxu0 0.0
    %84 = vmatprep.subr.mxu0 0.0
    %85 = vmatpush1.msra.mxu0 0.0
    %86 = vmatprep.subr.mxu0 0.0
    %87 = vmatpush1.msra.mxu0 0.0
    %88 = vmatprep.subr.mxu0 0.0
    %89 = vmatpush1.msra.mxu0 %v49
    %90 = vmatprep.subr.mxu0 0.0
    %91 = vmatpush1.msra.mxu0 %v48
    %92 = vmatprep.subr.mxu0 0.0
    %93 = vmatpush1.msra.mxu0 %v47
    %94 = vmatprep.subr.mxu0 0.0
    %95 = vmatpush1.msra.mxu0 %v46
    %96 = vmatprep.subr.mxu0 0.0
    %97 = vmatpush2.msra.mxu0 0.0
    %98 = vmatprep.subr.mxu0 0.0
    %99 = vmatpush2.msra.mxu0 0.0
    %100 = vmatprep.subr.mxu0 0.0
    %101 = vmatpush2.msra.mxu0 0.0
    %102 = vmatprep.subr.mxu0 0.0
    %103 = vmatpush2.msra.mxu0 0.0
    %104 = vmatprep.subr.mxu0 0.0
    %105 = vmatpush2.msra.mxu0 0.0
    %106 = vmatprep.subr.mxu0 0.0
    %107 = vmatpush2.msra.mxu0 0.0
    %108 = vmatprep.subr.mxu0 0.0
    %109 = vmatpush2.msra.mxu0 0.0
    %110 = vmatprep.subr.mxu0 0.0
    %111 = vmatpush2.msra.mxu0 0.0
    %112 = vmatprep.subr.mxu0 0.0
    %113 = vmatpush2.msra.mxu0 0.0
    %114 = vmatprep.subr.mxu0 0.0
    %115 = vmatpush2.msra.mxu0 0.0
    %116 = vmatprep.subr.mxu0 0.0
    %117 = vmatpush2.msra.mxu0 0.0
    %118 = vmatprep.subr.mxu0 0.0
    %119 = vmatpush2.msra.mxu0 0.0
    %120 = vmatprep.subr.mxu0 0.0
    %121 = vmatpush2.msra.mxu0 0.0
    %122 = vmatprep.subr.mxu0 0.0
    %123 = vmatpush2.msra.mxu0 0.0
    %124 = vmatprep.subr.mxu0 0.0
    %125 = vmatpush2.msra.mxu0 0.0
    %126 = vmatprep.subr.mxu0 0.0
    %127 = vmatpush2.msra.mxu0 0.0
    %128 = vmatprep.mubr.f32.mxu0 0.0
    %129 = vmatmul.mubr.f32.gmra.mxu0 %v59
    %v130 = vpop.f32.mrf.mxu0
    %v131 = vadd.f32 %v55, %v130
    %v132 = vpop.f32.mrf.mxu0
    %133 = vmatprep.mubr.f32.mxu0 0.0
    %134 = vmatmul.mubr.f32.gmra.mxu0 %v62
    %v135 = vpop.f32.mrf.mxu0
    %v136 = vadd.f32 %v55, %v135
    %v137 = vpop.f32.mrf.mxu0
    %138 = vdwg.mxu0
    %v139 = vld [vmem:[%s1] sm:$0xff]
    %v140 = vld [vmem:[%s1 + $0x8] sm:$0xff]
    %v141 = vld [vmem:[%s1 + $0x10] sm:$0xff]
    %v142 = vld [vmem:[%s1 + $0x18] sm:$0xff]
    %v143 = vld [vmem:[%s5] sm:$0xff]
    %v144 = vld [vmem:[%s5 + $0x8] sm:$0xff]
    %v145 = vld [vmem:[%s5 + $0x10] sm:$0xff]
    %v146 = vld [vmem:[%s5 + $0x18] sm:$0xff]
    %v147 = vld [vmem:[%s5 + $0x20] sm:$0xff]
    %v148 = vld [vmem:[%s5 + $0x28] sm:$0xff]
    %v149 = vld [vmem:[%s6] sm:$0x1]
    %v151 = vlaneseq
    %v152 = vshrl.u32 %v151, 7
    %v153 = vsub.s32 0, %v152
    %v154 = vrot.slane %v149, %v153
    %vm156 = vcmask 392192
    %v158 = vsel %vm156, %v139, 0
    %v161 = vsel %vm156, %v140, 0
    %v164 = vsel %vm156, %v141, 0
    %v167 = vsel %vm156, %v142, 0
    %169 = vmatprep.subr.mxu0 0.0
    %170 = vmatpush1.msra.mxu0 0.0
    %171 = vmatprep.subr.mxu0 0.0
    %172 = vmatpush1.msra.mxu0 0.0
    %173 = vmatprep.subr.mxu0 0.0
    %174 = vmatpush1.msra.mxu0 0.0
    %175 = vmatprep.subr.mxu0 0.0
    %176 = vmatpush1.msra.mxu0 0.0
    %177 = vmatprep.subr.mxu0 0.0
    %178 = vmatpush1.msra.mxu0 0.0
    %179 = vmatprep.subr.mxu0 0.0
    %180 = vmatpush1.msra.mxu0 0.0
    %181 = vmatprep.subr.mxu0 0.0
    %182 = vmatpush1.msra.mxu0 0.0
    %183 = vmatprep.subr.mxu0 0.0
    %184 = vmatpush1.msra.mxu0 0.0
    %185 = vmatprep.subr.mxu0 0.0
    %186 = vmatpush1.msra.mxu0 0.0
    %187 = vmatprep.subr.mxu0 0.0
    %188 = vmatpush1.msra.mxu0 0.0
    %189 = vmatprep.subr.mxu0 0.0
    %190 = vmatpush1.msra.mxu0 %v148
    %191 = vmatprep.subr.mxu0 0.0
    %192 = vmatpush1.msra.mxu0 %v147
    %193 = vmatprep.subr.mxu0 0.0
    %194 = vmatpush1.msra.mxu0 %v146
    %195 = vmatprep.subr.mxu0 0.0
    %196 = vmatpush1.msra.mxu0 %v145
    %197 = vmatprep.subr.mxu0 0.0
    %198 = vmatpush1.msra.mxu0 %v144
    %199 = vmatprep.subr.mxu0 0.0
    %200 = vmatpush1.msra.mxu0 %v143
    %201 = vmatprep.subr.mxu0 0.0
    %202 = vmatpush2.msra.mxu0 0.0
    %203 = vmatprep.subr.mxu0 0.0
    %204 = vmatpush2.msra.mxu0 0.0
    %205 = vmatprep.subr.mxu0 0.0
    %206 = vmatpush2.msra.mxu0 0.0
    %207 = vmatprep.subr.mxu0 0.0
    %208 = vmatpush2.msra.mxu0 0.0
    %209 = vmatprep.subr.mxu0 0.0
    %210 = vmatpush2.msra.mxu0 0.0
    %211 = vmatprep.subr.mxu0 0.0
    %212 = vmatpush2.msra.mxu0 0.0
    %213 = vmatprep.subr.mxu0 0.0
    %214 = vmatpush2.msra.mxu0 0.0
    %215 = vmatprep.subr.mxu0 0.0
    %216 = vmatpush2.msra.mxu0 0.0
    %217 = vmatprep.subr.mxu0 0.0
    %218 = vmatpush2.msra.mxu0 0.0
    %219 = vmatprep.subr.mxu0 0.0
    %220 = vmatpush2.msra.mxu0 0.0
    %221 = vmatprep.subr.mxu0 0.0
    %222 = vmatpush2.msra.mxu0 0.0
    %223 = vmatprep.subr.mxu0 0.0
    %224 = vmatpush2.msra.mxu0 0.0
    %225 = vmatprep.subr.mxu0 0.0
    %226 = vmatpush2.msra.mxu0 0.0
    %227 = vmatprep.subr.mxu0 0.0
    %228 = vmatpush2.msra.mxu0 0.0
    %229 = vmatprep.subr.mxu0 0.0
    %230 = vmatpush2.msra.mxu0 0.0
    %231 = vmatprep.subr.mxu0 0.0
    %232 = vmatpush2.msra.mxu0 0.0
    %233 = vmatprep.mubr.f32.mxu0 0.0
    %234 = vmatmul.mubr.f32.gmra.mxu0 %v158
    %v235 = vpop.f32.mrf.mxu0
    %v236 = vadd.f32 %v154, %v235
    %v237 = vpop.f32.mrf.mxu0
    %238 = vmatprep.mubr.f32.mxu0 0.0
    %239 = vmatmul.mubr.f32.gmra.mxu0 %v161
    %v240 = vpop.f32.mrf.mxu0
    %v241 = vadd.f32 %v154, %v240
    %v242 = vpop.f32.mrf.mxu0
    %243 = vmatprep.mubr.f32.mxu0 0.0
    %244 = vmatmul.mubr.f32.gmra.mxu0 %v164
    %v245 = vpop.f32.mrf.mxu0
    %v246 = vadd.f32 %v154, %v245
    %v247 = vpop.f32.mrf.mxu0
    %248 = vmatprep.mubr.f32.mxu0 0.0
    %249 = vmatmul.mubr.f32.gmra.mxu0 %v167
    %v250 = vpop.f32.mrf.mxu0
    %v251 = vadd.f32 %v154, %v250
    %v252 = vpop.f32.mrf.mxu0
    %253 = vdwg.mxu0
    %v255 = vsel %vm57, %v131, 0
    %v258 = vsel %vm57, %v236, 0
    %v261 = vsel %vm57, %v241, 0
    %263 = vmatprep.subr.mxu0 0.0
    %264 = vmatpush1.xpose.msra.mxu0 0.0
    %265 = vmatprep.subr.mxu0 0.0
    %266 = vmatpush1.xpose.msra.mxu0 0.0
    %267 = vmatprep.subr.mxu0 0.0
    %268 = vmatpush1.xpose.msra.mxu0 0.0
    %269 = vmatprep.subr.mxu0 0.0
    %270 = vmatpush1.xpose.msra.mxu0 0.0
    %271 = vmatprep.subr.mxu0 0.0
    %272 = vmatpush1.xpose.msra.mxu0 0.0
    %273 = vmatprep.subr.mxu0 0.0
    %274 = vmatpush1.xpose.msra.mxu0 0.0
    %275 = vmatprep.subr.mxu0 0.0
    %276 = vmatpush1.xpose.msra.mxu0 0.0
    %277 = vmatprep.subr.mxu0 0.0
    %278 = vmatpush1.xpose.msra.mxu0 0.0
    %279 = vmatprep.subr.mxu0 0.0
    %280 = vmatpush1.xpose.msra.mxu0 0.0
    %281 = vmatprep.subr.mxu0 0.0
    %282 = vmatpush1.xpose.msra.mxu0 0.0
    %283 = vmatprep.subr.mxu0 0.0
    %284 = vmatpush1.xpose.msra.mxu0 0.0
    %285 = vmatprep.subr.mxu0 0.0
    %286 = vmatpush1.xpose.msra.mxu0 0.0
    %287 = vmatprep.subr.mxu0 0.0
    %288 = vmatpush1.xpose.msra.mxu0 0.0
    %289 = vmatprep.subr.mxu0 0.0
    %290 = vmatpush1.xpose.msra.mxu0 0.0
    %291 = vmatprep.subr.mxu0 0.0
    %292 = vmatpush1.xpose.msra.mxu0 %v261
    %293 = vmatprep.subr.mxu0 0.0
    %294 = vmatpush1.xpose.msra.mxu0 %v258
    %295 = vmatprep.subr.mxu0 0.0
    %296 = vmatpush2.xpose.msra.mxu0 0.0
    %297 = vmatprep.subr.mxu0 0.0
    %298 = vmatpush2.xpose.msra.mxu0 0.0
    %299 = vmatprep.subr.mxu0 0.0
    %300 = vmatpush2.xpose.msra.mxu0 0.0
    %301 = vmatprep.subr.mxu0 0.0
    %302 = vmatpush2.xpose.msra.mxu0 0.0
    %303 = vmatprep.subr.mxu0 0.0
    %304 = vmatpush2.xpose.msra.mxu0 0.0
    %305 = vmatprep.subr.mxu0 0.0
    %306 = vmatpush2.xpose.msra.mxu0 0.0
    %307 = vmatprep.subr.mxu0 0.0
    %308 = vmatpush2.xpose.msra.mxu0 0.0
    %309 = vmatprep.subr.mxu0 0.0
    %310 = vmatpush2.xpose.msra.mxu0 0.0
    %311 = vmatprep.subr.mxu0 0.0
    %312 = vmatpush2.xpose.msra.mxu0 0.0
    %313 = vmatprep.subr.mxu0 0.0
    %314 = vmatpush2.xpose.msra.mxu0 0.0
    %315 = vmatprep.subr.mxu0 0.0
    %316 = vmatpush2.xpose.msra.mxu0 0.0
    %317 = vmatprep.subr.mxu0 0.0
    %318 = vmatpush2.xpose.msra.mxu0 0.0
    %319 = vmatprep.subr.mxu0 0.0
    %320 = vmatpush2.xpose.msra.mxu0 0.0
    %321 = vmatprep.subr.mxu0 0.0
    %322 = vmatpush2.xpose.msra.mxu0 0.0
    %323 = vmatprep.subr.mxu0 0.0
    %324 = vmatpush2.xpose.msra.mxu0 0.0
    %325 = vmatprep.subr.mxu0 0.0
    %326 = vmatpush2.xpose.msra.mxu0 0.0
    %327 = vmatprep.mubr.f32.mxu0 0.0
    %328 = vmatmul.mubr.f32.gmra.mxu0 %v255
    %v329 = vpop.f32.mrf.mxu0
    %v330 = vadd.f32 0.0, %v329
    %v331 = vpop.f32.mrf.mxu0
    %332 = vdwg.mxu0
    %vm333 = vcmask 130048
    %v334 = vsel %vm333, %v330, -inf
    %335 = vmax.xlane.f32.xlu0 %v334
    %v336 = vpop.xlane.xlu0 %335
    %v337 = vsub.f32 %v330, %v336
    %v338 = vmul.f32 %v337, 1.442695
    %v339 = vpow.pop %v338
    %v340 = vsel %vm333, %v339, 0.0
    %341 = vadd.xlane.f32.xlu0 %v340
    %v342 = vpop.xlane.xlu0 %341
    %v343 = vrcp.pop %v342
    %v344 = vmul.f32 %v339, %v343
    %345 = vst.msk [vmem:[#allocation5] sm:$0xff] %vm333, %v344
    %v346 = vld [vmem:[#allocation2] sm:$0xff]
    %vm347 = vcmp.ne.f32.partialorder %v346, -100.0
    %v348 = vsub.f32 %v344, %v346
    %v349 = vsel %vm347, %v348, 0.0
    %v350 = vmul.f32 %v349, %v349
    %v351 = vsel %vm333, %v350, 0.0
    %352 = vadd.xlane.f32.xlu0 %v351
    %v353 = vpop.xlane.xlu0 %352
    %v354 = vrot.slane %v353, 4
    %v355 = vadd.f32 %v353, %v354
    %v356 = vrot.slane %v355, 2
    %v357 = vadd.f32 %v355, %v356
    %v358 = vrot.slane %v357, 1
    %v359 = vadd.f32 %v357, %v358
    %s360 = vtos %v359
    %s361 = sadd.f32 %s360, 0.0
    %v362 = vsel %vm347, 1, 0
    %v363 = vcvt.s32.f32 %v362
    %v364 = vsel %vm333, %v363, 0.0
    %365 = vadd.xlane.f32.xlu0 %v364
    %v366 = vpop.xlane.xlu0 %365
    %v367 = vrot.slane %v366, 4
    %v368 = vadd.f32 %v366, %v367
    %v369 = vrot.slane %v368, 2
    %v370 = vadd.f32 %v368, %v369
    %v371 = vrot.slane %v370, 1
    %v372 = vadd.f32 %v370, %v371
    %s373 = vtos %v372
    %s374 = sadd.f32 %s373, 0.0
    %v376 = vsel %vm57, %v136, 0
    %v379 = vsel %vm57, %v246, 0
    %v382 = vsel %vm57, %v251, 0
    %384 = vmatprep.subr.mxu0 0.0
    %385 = vmatpush1.xpose.msra.mxu0 0.0
    %386 = vmatprep.subr.mxu0 0.0
    %387 = vmatpush1.xpose.msra.mxu0 0.0
    %388 = vmatprep.subr.mxu0 0.0
    %389 = vmatpush1.xpose.msra.mxu0 0.0
    %390 = vmatprep.subr.mxu0 0.0
    %391 = vmatpush1.xpose.msra.mxu0 0.0
    %392 = vmatprep.subr.mxu0 0.0
    %393 = vmatpush1.xpose.msra.mxu0 0.0
    %394 = vmatprep.subr.mxu0 0.0
    %395 = vmatpush1.xpose.msra.mxu0 0.0
    %396 = vmatprep.subr.mxu0 0.0
    %397 = vmatpush1.xpose.msra.mxu0 0.0
    %398 = vmatprep.subr.mxu0 0.0
    %399 = vmatpush1.xpose.msra.mxu0 0.0
    %400 = vmatprep.subr.mxu0 0.0
    %401 = vmatpush1.xpose.msra.mxu0 0.0
    %402 = vmatprep.subr.mxu0 0.0
    %403 = vmatpush1.xpose.msra.mxu0 0.0
    %404 = vmatprep.subr.mxu0 0.0
    %405 = vmatpush1.xpose.msra.mxu0 0.0
    %406 = vmatprep.subr.mxu0 0.0
    %407 = vmatpush1.xpose.msra.mxu0 0.0
    %408 = vmatprep.subr.mxu0 0.0
    %409 = vmatpush1.xpose.msra.mxu0 0.0
    %410 = vmatprep.subr.mxu0 0.0
    %411 = vmatpush1.xpose.msra.mxu0 0.0
    %412 = vmatprep.subr.mxu0 0.0
    %413 = vmatpush1.xpose.msra.mxu0 %v382
    %414 = vmatprep.subr.mxu0 0.0
    %415 = vmatpush1.xpose.msra.mxu0 %v379
    %416 = vmatprep.subr.mxu0 0.0
    %417 = vmatpush2.xpose.msra.mxu0 0.0
    %418 = vmatprep.subr.mxu0 0.0
    %419 = vmatpush2.xpose.msra.mxu0 0.0
    %420 = vmatprep.subr.mxu0 0.0
    %421 = vmatpush2.xpose.msra.mxu0 0.0
    %422 = vmatprep.subr.mxu0 0.0
    %423 = vmatpush2.xpose.msra.mxu0 0.0
    %424 = vmatprep.subr.mxu0 0.0
    %425 = vmatpush2.xpose.msra.mxu0 0.0
    %426 = vmatprep.subr.mxu0 0.0
    %427 = vmatpush2.xpose.msra.mxu0 0.0
    %428 = vmatprep.subr.mxu0 0.0
    %429 = vmatpush2.xpose.msra.mxu0 0.0
    %430 = vmatprep.subr.mxu0 0.0
    %431 = vmatpush2.xpose.msra.mxu0 0.0
    %432 = vmatprep.subr.mxu0 0.0
    %433 = vmatpush2.xpose.msra.mxu0 0.0
    %434 = vmatprep.subr.mxu0 0.0
    %435 = vmatpush2.xpose.msra.mxu0 0.0
    %436 = vmatprep.subr.mxu0 0.0
    %437 = vmatpush2.xpose.msra.mxu0 0.0
    %438 = vmatprep.subr.mxu0 0.0
    %439 = vmatpush2.xpose.msra.mxu0 0.0
    %440 = vmatprep.subr.mxu0 0.0
    %441 = vmatpush2.xpose.msra.mxu0 0.0
    %442 = vmatprep.subr.mxu0 0.0
    %443 = vmatpush2.xpose.msra.mxu0 0.0
    %444 = vmatprep.subr.mxu0 0.0
    %445 = vmatpush2.xpose.msra.mxu0 0.0
    %446 = vmatprep.subr.mxu0 0.0
    %447 = vmatpush2.xpose.msra.mxu0 0.0
    %448 = vmatprep.mubr.f32.mxu0 0.0
    %449 = vmatmul.mubr.f32.gmra.mxu0 %v376
    %v450 = vpop.f32.mrf.mxu0
    %v451 = vadd.f32 0.0, %v450
    %v452 = vpop.f32.mrf.mxu0
    %453 = vdwg.mxu0
    %v454 = vsel %vm333, %v451, -inf
    %455 = vmax.xlane.f32.xlu0 %v454
    %v456 = vpop.xlane.xlu0 %455
    %v457 = vsub.f32 %v451, %v456
    %v458 = vmul.f32 %v457, 1.442695
    %v459 = vpow.pop %v458
    %v460 = vsel %vm333, %v459, 0.0
    %461 = vadd.xlane.f32.xlu0 %v460
    %v462 = vpop.xlane.xlu0 %461
    %v463 = vrcp.pop %v462
    %v464 = vmul.f32 %v459, %v463
    %s465 = scalar_lea.vmem [#allocation5], 8
    %466 = vst.msk [vmem:[%s465] sm:$0xff] %vm333, %v464
    %s467 = scalar_lea.vmem [#allocation2], 8
    %v468 = vld [vmem:[%s467] sm:$0xff]
    %vm469 = vcmp.ne.f32.partialorder %v468, -100.0
    %v470 = vsub.f32 %v464, %v468
    %v471 = vsel %vm469, %v470, 0.0
    %v472 = vmul.f32 %v471, %v471
    %v473 = vsel %vm333, %v472, 0.0
    %474 = vadd.xlane.f32.xlu0 %v473
    %v475 = vpop.xlane.xlu0 %474
    %v476 = vrot.slane %v475, 4
    %v477 = vadd.f32 %v475, %v476
    %v478 = vrot.slane %v477, 2
    %v479 = vadd.f32 %v477, %v478
    %v480 = vrot.slane %v479, 1
    %v481 = vadd.f32 %v479, %v480
    %s482 = vtos %v481
    %s483 = sadd.f32 %s361, %s482
    %v484 = vsel %vm469, 1, 0
    %v485 = vcvt.s32.f32 %v484
    %v486 = vsel %vm333, %v485, 0.0
    %487 = vadd.xlane.f32.xlu0 %v486
    %v488 = vpop.xlane.xlu0 %487
    %v489 = vrot.slane %v488, 4
    %v490 = vadd.f32 %v488, %v489
    %v491 = vrot.slane %v490, 2
    %v492 = vadd.f32 %v490, %v491
    %v493 = vrot.slane %v492, 1
    %v494 = vadd.f32 %v492, %v493
    %s495 = vtos %v494
    %s496 = sadd.f32 %s374, %s495
    %v497 = vstv %s496
    %v498 = vrcp.pop %v497
    %s499 = vtos %v498
    %s500 = smul.f32 %s483, %s499
    %v501 = vstv %s500
    %vm502 = vcmask 0
    %503 = vst.msk [vmem:[#allocation6] sm:$0x1] %vm502, %v501
    // Predicated region
    $region34: #{tpu_custom_call.1} parent=1 // pred_check
      _
    $region35: #{tpu_custom_call.1} parent=1 // pred_check_branch
      %505 = sbr.rel (0) target = $region37
    $region36: #{tpu_custom_call.1} parent=1 // pred_region
      %s507 = ssub.s32 256, 256
      %508 = vsyncadd [#allocation4], %s507
      %s509 = sshll.u32 [#allocation5], 4
      %s510 = int_to_ptr.vmem [resolvable:$true] %s509
      %515 = dma.vmem_to_hbm [thread:$0]  %s510, 256, %s7, [#allocation4], 128, 128, 8
    $region37: #{tpu_custom_call.1} parent=1 // pred_fallthru
      _
    // Predicated region
    $region38: #{tpu_custom_call.1} parent=1 // pred_check
      _
    $region39: #{tpu_custom_call.1} parent=1 // pred_check_branch
      %517 = sbr.rel (0) target = $region41
    $region40: #{tpu_custom_call.1} parent=1 // pred_region
      %s519 = ssub.s32 16, 16
      %520 = vsyncadd [#allocation7], %s519
      %s522 = sshll.u32 [#allocation6], 4
      %s523 = int_to_ptr.vmem [resolvable:$true] %s522
      %525 = dma.vmem_to_hbm [thread:$0]  %s523, 16, %s8, [#allocation7]
    $region41: #{tpu_custom_call.1} parent=1 // pred_fallthru
      _
    // Predicated region
    $region42: #{tpu_custom_call.1} parent=1 // pred_check
      _
    $region43: #{tpu_custom_call.1} parent=1 // pred_check_branch
      %527 = sbr.rel (0) target = $region45
    $region44: #{tpu_custom_call.1} parent=1 // pred_region
      %528 = dma.done [#allocation4], 256
    $region45: #{tpu_custom_call.1} parent=1 // pred_fallthru
      _
    // Predicated region
    $region46: #{tpu_custom_call.1} parent=1 // pred_check
      _
    $region47: #{tpu_custom_call.1} parent=1 // pred_check_branch
      %530 = sbr.rel (0) target = $region49
    $region48: #{tpu_custom_call.1} parent=1 // pred_region
      %531 = dma.done [#allocation7], 16
    $region49: #{tpu_custom_call.1} parent=1 // pred_fallthru
      _
    %532 = vsyncpa [#allocation3], 1
    %533 = vsyncpa [#allocation4], 1
    %534 = vsyncpa [#allocation7], 1

</llo_original>
